<compile_context>
chip_gen: v5e
topology: v5e:2x2
jax: 0.10.0
libtpu: 0.0.40
codegen_flags: <defaults>
</compile_context>

<pallas_src>
import functools

import jax
import jax.numpy as jnp
from jax.experimental import pallas as pl
from jax.experimental.pallas import tpu as pltpu


# ---------------------------------------------------------------------------
# Tile-size selection helpers
# ---------------------------------------------------------------------------

_VMEM_LIMIT = 32 * 1024 * 1024          # scoped-VMEM limit we request
_FUSED_BUDGET = 24 * 1024 * 1024        # working-set budget for the fused path


def _pick_c_tile(c, min_sub):
    """Channel tile for the two-pass path: multiple of min_sub dividing C, else full C."""
    if c % min_sub != 0:
        return c                        # full-C block is always legal
    cap = min(c, 512)
    t = (cap // min_sub) * min_sub
    while t >= min_sub:
        if c % t == 0:
            return t
        t -= min_sub
    return c


def _pick_l_tile(l, c_blk, itemsize, tile_bytes=2 * 1024 * 1024):
    """Lane tile: large multiple of 128 dividing L, capped by a VMEM budget."""
    max_l = max(128, tile_bytes // (max(c_blk, 1) * itemsize))
    if l <= max_l:
        return l                        # full-L block
    t = (max_l // 128) * 128
    while t >= 128:
        if l % t == 0:
            return t
        t -= 128
    # TODO(synk): L not a multiple of 128 and too large for one block would need
    # a masked cdiv-grid reduction; fall back to a single full-L block for now.
    return l


def _pick_fused_c_tile(n, c, l, itemsize, min_sub, budget=_FUSED_BUDGET):
    """Channel tile for the fused single-read path, or None if it can't fit."""
    # double-buffered input block + double-buffered output block
    per_c = 4 * n * l * itemsize
    if per_c <= 0:
        return None
    max_c = budget // per_c
    if max_c < 1:
        return None
    if c <= max_c:
        return c                        # whole C in one block
    if c % min_sub != 0:
        return None                     # full C doesn't fit and C can't be tiled cleanly
    t = (min(max_c, c) // min_sub) * min_sub
    while t >= min_sub:
        if c % t == 0:
            return t
        t -= min_sub
    return None


# ---------------------------------------------------------------------------
# Fused single-pass kernel: stats + normalize, one HBM read of x
# ---------------------------------------------------------------------------

def _bn_fused_kernel(x_ref, w_ref, b_ref, o_ref, mean_ref, uvar_ref,
                     *, numel, eps):
    x = x_ref[...].astype(jnp.float32)                         # (N, C_blk, L)

    # Per-channel sum / sum-of-squares: lane reduce (XLU) then leading-dim add.
    s = jnp.sum(jnp.sum(x, axis=2, keepdims=True), axis=0)     # (C_blk, 1)
    ss = jnp.sum(jnp.sum(x * x, axis=2, keepdims=True), axis=0)

    mean = s / numel
    sumvar = ss - s * mean                                     # same formula as ref
    inv_std = jax.lax.rsqrt(sumvar / numel + eps)
    scale = w_ref[...] * inv_std                               # fold affine once
    shift = b_ref[...] - mean * scale

    o_ref[...] = (x * scale[None, :, :] + shift[None, :, :]).astype(o_ref.dtype)
    mean_ref[...] = mean
    uvar_ref[...] = sumvar / max(numel - 1, 1)


# ---------------------------------------------------------------------------
# Two-pass fallback, pass 1: per-channel statistics over N*H*W
# ---------------------------------------------------------------------------

def _bn_stats_kernel(x_ref, w_ref, b_ref,
                     scale_ref, shift_ref, mean_ref, uvar_ref,
                     sum_acc, sq_acc, *, numel, eps):
    # Grid = (c_tiles, N, l_tiles); axes 1,2 are the reduction sweep.
    @pl.when((pl.program_id(1) == 0) & (pl.program_id(2) == 0))
    def _init():
        sum_acc[...] = jnp.zeros_like(sum_acc)
        sq_acc[...] = jnp.zeros_like(sq_acc)

    x = x_ref[0].astype(jnp.float32)                           # (C_blk, L_blk)
    sum_acc[...] += jnp.sum(x, axis=1, keepdims=True)          # (C_blk, 1)
    sq_acc[...] += jnp.sum(x * x, axis=1, keepdims=True)       # (C_blk, 1)

    @pl.when((pl.program_id(1) == pl.num_programs(1) - 1)
             & (pl.program_id(2) == pl.num_programs(2) - 1))
    def _finalize():
        s = sum_acc[...]
        mean = s / numel
        sumvar = sq_acc[...] - s * mean
        inv_std = jax.lax.rsqrt(sumvar / numel + eps)
        scale = w_ref[...] * inv_std                           # fold affine once
        shift = b_ref[...] - mean * scale
        scale_ref[...] = scale
        shift_ref[...] = shift
        mean_ref[...] = mean
        uvar_ref[...] = sumvar / max(numel - 1, 1)


# ---------------------------------------------------------------------------
# Two-pass fallback, pass 2: out = x * scale[c] + shift[c]
# ---------------------------------------------------------------------------

def _bn_apply_kernel(x_ref, scale_ref, shift_ref, o_ref):
    x = x_ref[0].astype(jnp.float32)                           # (C_blk, L_blk)
    o_ref[0] = (x * scale_ref[...] + shift_ref[...]).astype(o_ref.dtype)


# ---------------------------------------------------------------------------
# Wrapper (forward pass of BatchNorm2dReimpl)
# ---------------------------------------------------------------------------

def batchnorm2d_reimpl(x, weight, bias, running_mean, running_var,
                       eps=1e-5, momentum=0.1):
    """x: (N, C, H, W); weight/bias/running_*: (C,).

    Returns (output (N,C,H,W), new_running_mean (C,), new_running_var (C,)).
    """
    n, c, h, w = x.shape
    l = h * w
    numel = n * l

    # Free reshapes only (no transpose, no extra HBM traffic).
    x3 = x.reshape(n, c, l)
    w2 = weight.astype(jnp.float32).reshape(c, 1)
    b2 = bias.astype(jnp.float32).reshape(c, 1)

    itemsize = jnp.dtype(x.dtype).itemsize
    min_sub = 8 * max(1, 4 // itemsize)        # 8 for f32, 16 for bf16

    c_blk_fused = _pick_fused_c_tile(n, c, l, itemsize, min_sub)

    if c_blk_fused is not None:
        # ---- fused single-read path ----------------------------------------
        grid = (c // c_blk_fused,)
        x_spec = pl.BlockSpec((n, c_blk_fused, l), lambda ci: (0, ci, 0))
        cvec_spec = pl.BlockSpec((c_blk_fused, 1), lambda ci: (ci, 0))

        out3, mean, unbias_var = pl.pallas_call(
            functools.partial(_bn_fused_kernel, numel=numel, eps=eps),
            grid=grid,
            in_specs=[x_spec, cvec_spec, cvec_spec],
            out_specs=(x_spec, cvec_spec, cvec_spec),
            out_shape=(
                jax.ShapeDtypeStruct((n, c, l), x.dtype),    # output
                jax.ShapeDtypeStruct((c, 1), jnp.float32),   # mean
                jax.ShapeDtypeStruct((c, 1), jnp.float32),   # unbiased var
            ),
            compiler_params=pltpu.CompilerParams(
                dimension_semantics=("parallel",),
                vmem_limit_bytes=_VMEM_LIMIT),
        )(x3, w2, b2)
    else:
        # ---- two-pass fallback ----------------------------------------------
        c_blk = _pick_c_tile(c, min_sub)
        l_blk = _pick_l_tile(l, c_blk, itemsize)
        grid = (c // c_blk, n, l // l_blk)

        x_spec = pl.BlockSpec((1, c_blk, l_blk), lambda ci, ni, li: (ni, ci, li))
        cvec_spec = pl.BlockSpec((c_blk, 1), lambda ci, ni, li: (ci, 0))

        # pass 1: statistics
        scale, shift, mean, unbias_var = pl.pallas_call(
            functools.partial(_bn_stats_kernel, numel=numel, eps=eps),
            grid=grid,
            in_specs=[x_spec, cvec_spec, cvec_spec],
            out_specs=(cvec_spec, cvec_spec, cvec_spec, cvec_spec),
            out_shape=(
                jax.ShapeDtypeStruct((c, 1), jnp.float32),   # scale
                jax.ShapeDtypeStruct((c, 1), jnp.float32),   # shift
                jax.ShapeDtypeStruct((c, 1), jnp.float32),   # mean
                jax.ShapeDtypeStruct((c, 1), jnp.float32),   # unbiased var
            ),
            scratch_shapes=[pltpu.VMEM((c_blk, 1), jnp.float32),
                            pltpu.VMEM((c_blk, 1), jnp.float32)],
            compiler_params=pltpu.CompilerParams(
                dimension_semantics=("parallel", "arbitrary", "arbitrary"),
                vmem_limit_bytes=_VMEM_LIMIT),
        )(x3, w2, b2)

        # pass 2: normalization
        out3 = pl.pallas_call(
            _bn_apply_kernel,
            grid=grid,
            in_specs=[x_spec, cvec_spec, cvec_spec],
            out_specs=x_spec,
            out_shape=jax.ShapeDtypeStruct((n, c, l), x.dtype),
            compiler_params=pltpu.CompilerParams(
                dimension_semantics=("parallel", "parallel", "parallel"),
                vmem_limit_bytes=_VMEM_LIMIT),
        )(x3, scale, shift)

    # Running-stat buffer updates (functional, tiny (C,) ops in plain JAX).
    mean = mean.reshape(c)
    unbias_var = unbias_var.reshape(c)
    new_running_mean = (1 - momentum) * running_mean + momentum * mean
    new_running_var = (1 - momentum) * running_var + momentum * unbias_var

    return out3.reshape(n, c, h, w), new_running_mean, new_running_var


# ---------------------------------------------------------------------------
# Pure-JAX reference (mirrors the PyTorch module)
# ---------------------------------------------------------------------------

def _reference(x, weight, bias, running_mean, running_var, eps, momentum):
    n, c, h, w = x.shape
    numel = n * h * w
    x2d = jnp.transpose(x, (1, 0, 2, 3)).reshape(c, numel).astype(jnp.float32)
    s = x2d.sum(axis=1)
    ss = (x2d ** 2).sum(axis=1)
    mean = s / numel
    sumvar = ss - s * mean
    bias_var = sumvar / numel
    unbias_var = sumvar / (numel - 1)
    inv_std = 1.0 / jnp.sqrt(bias_var + eps)
    out2d = (x2d - mean[:, None]) * inv_std[:, None] * weight[:, None] + bias[:, None]
    out = jnp.transpose(out2d.reshape(c, n, h, w), (1, 0, 2, 3))
    new_rm = (1 - momentum) * running_mean + momentum * mean
    new_rv = (1 - momentum) * running_var + momentum * unbias_var
    return out, new_rm, new_rv


if __name__ == "__main__":
    key = jax.random.PRNGKey(0)
    kx, kw = jax.random.split(key)

    N, C, H, W = 2, 4, 16, 16
    x = jax.random.normal(kx, (N, C, H, W), dtype=jnp.float32)

    # reset_parameters(): weight ~ U[0,1), bias = 0, running stats = (0, 1).
    weight = jax.random.uniform(kw, (C,), dtype=jnp.float32)
    bias = jnp.zeros((C,), dtype=jnp.float32)
    running_mean = jnp.zeros((C,), dtype=jnp.float32)
    running_var = jnp.ones((C,), dtype=jnp.float32)

    out, new_rm, new_rv = batchnorm2d_reimpl(
        x, weight, bias, running_mean, running_var, eps=1e-5, momentum=0.1)
    out = jax.block_until_ready(out)
    jax.block_until_ready(new_rm)
    jax.block_until_ready(new_rv)

    ref_out, ref_rm, ref_rv = _reference(
        x, weight, bias, running_mean, running_var, 1e-5, 0.1)

    assert out.shape == (N, C, H, W)
    assert jnp.allclose(out, ref_out, atol=1e-4, rtol=1e-4)
    assert jnp.allclose(new_rm, ref_rm, atol=1e-5, rtol=1e-5)
    assert jnp.allclose(new_rv, ref_rv, atol=1e-5, rtol=1e-5)

    print("KERNEL_OK")
</pallas_src>

<mosaic_0001>
module attributes {stable_mosaic.version = 11 : i64} {
  func.func @_bn_fused_kernel(%arg0: i32, %arg1: memref<2x4x256xf32, #tpu.memory_space<vmem>>, %arg2: memref<4x1xf32, #tpu.memory_space<vmem>>, %arg3: memref<4x1xf32, #tpu.memory_space<vmem>>, %arg4: memref<2x4x256xf32, #tpu.memory_space<vmem>>, %arg5: memref<4x1xf32, #tpu.memory_space<vmem>>, %arg6: memref<4x1xf32, #tpu.memory_space<vmem>>) attributes {dimension_semantics = [#tpu.dimension_semantics<parallel>], iteration_bounds = array<i64: 1>, scalar_prefetch = 0 : i64, scratch_operands = 0 : i64, tpu.core_type = #tpu.core_type<tc>, window_params = [{transform_indices = @transform_0, window_bounds = array<i64: 2, 4, 256>}, {transform_indices = @transform_1, window_bounds = array<i64: 4, 1>}, {transform_indices = @transform_2, window_bounds = array<i64: 4, 1>}, {transform_indices = @transform_3, window_bounds = array<i64: 2, 4, 256>}, {transform_indices = @transform_4, window_bounds = array<i64: 4, 1>}, {transform_indices = @transform_5, window_bounds = array<i64: 4, 1>}]} {
    %c0 = arith.constant 0 : index
    %c0_0 = arith.constant 0 : index
    %c0_1 = arith.constant 0 : index
    %0 = vector.load %arg1[%c0, %c0_0, %c0_1] : memref<2x4x256xf32, #tpu.memory_space<vmem>>, vector<2x4x256xf32>
    %cst = arith.constant dense<0.000000e+00> : vector<2x4xf32>
    %1 = vector.multi_reduction <add>, %0, %cst [2] : vector<2x4x256xf32> to vector<2x4xf32>
    %2 = vector.shape_cast %1 : vector<2x4xf32> to vector<2x4x1xf32>
    %cst_2 = arith.constant dense<0.000000e+00> : vector<4x1xf32>
    %3 = vector.multi_reduction <add>, %2, %cst_2 [0] : vector<2x4x1xf32> to vector<4x1xf32>
    %4 = arith.mulf %0, %0 : vector<2x4x256xf32>
    %cst_3 = arith.constant dense<0.000000e+00> : vector<2x4xf32>
    %5 = vector.multi_reduction <add>, %4, %cst_3 [2] : vector<2x4x256xf32> to vector<2x4xf32>
    %6 = vector.shape_cast %5 : vector<2x4xf32> to vector<2x4x1xf32>
    %cst_4 = arith.constant dense<0.000000e+00> : vector<4x1xf32>
    %7 = vector.multi_reduction <add>, %6, %cst_4 [0] : vector<2x4x1xf32> to vector<4x1xf32>
    %cst_5 = arith.constant 5.120000e+02 : f32
    %8 = vector.broadcast %cst_5 : f32 to vector<4x1xf32>
    %9 = arith.divf %3, %8 : vector<4x1xf32>
    %10 = arith.mulf %3, %9 : vector<4x1xf32>
    %11 = arith.subf %7, %10 : vector<4x1xf32>
    %cst_6 = arith.constant 5.120000e+02 : f32
    %12 = vector.broadcast %cst_6 : f32 to vector<4x1xf32>
    %13 = arith.divf %11, %12 : vector<4x1xf32>
    %cst_7 = arith.constant 9.99999974E-6 : f32
    %14 = vector.broadcast %cst_7 : f32 to vector<4x1xf32>
    %15 = arith.addf %13, %14 : vector<4x1xf32>
    %16 = math.rsqrt %15 : vector<4x1xf32>
    %c0_8 = arith.constant 0 : index
    %c0_9 = arith.constant 0 : index
    %17 = vector.load %arg2[%c0_8, %c0_9] : memref<4x1xf32, #tpu.memory_space<vmem>>, vector<4x1xf32>
    %18 = arith.mulf %17, %16 : vector<4x1xf32>
    %c0_10 = arith.constant 0 : index
    %c0_11 = arith.constant 0 : index
    %19 = vector.load %arg3[%c0_10, %c0_11] : memref<4x1xf32, #tpu.memory_space<vmem>>, vector<4x1xf32>
    %20 = arith.mulf %9, %18 : vector<4x1xf32>
    %21 = arith.subf %19, %20 : vector<4x1xf32>
    %22 = vector.shape_cast %18 : vector<4x1xf32> to vector<1x4x1xf32>
    %23 = vector.broadcast %22 : vector<1x4x1xf32> to vector<2x4x256xf32>
    %24 = arith.mulf %0, %23 : vector<2x4x256xf32>
    %25 = vector.shape_cast %21 : vector<4x1xf32> to vector<1x4x1xf32>
    %26 = vector.broadcast %25 : vector<1x4x1xf32> to vector<2x4x256xf32>
    %27 = arith.addf %24, %26 : vector<2x4x256xf32>
    %c0_12 = arith.constant 0 : index
    %c0_13 = arith.constant 0 : index
    %c0_14 = arith.constant 0 : index
    %28 = vector.load %arg4[%c0_12, %c0_13, %c0_14] : memref<2x4x256xf32, #tpu.memory_space<vmem>>, vector<2x4x256xf32>
    tpu.vector_store %arg4[%c0_12, %c0_13, %c0_14], %27 {strides = array<i32>} : memref<2x4x256xf32, #tpu.memory_space<vmem>>, vector<2x4x256xf32>,
    %c0_15 = arith.constant 0 : index
    %c0_16 = arith.constant 0 : index
    %29 = vector.load %arg5[%c0_15, %c0_16] : memref<4x1xf32, #tpu.memory_space<vmem>>, vector<4x1xf32>
    tpu.vector_store %arg5[%c0_15, %c0_16], %9 {strides = array<i32>} : memref<4x1xf32, #tpu.memory_space<vmem>>, vector<4x1xf32>,
    %cst_17 = arith.constant 5.110000e+02 : f32
    %30 = vector.broadcast %cst_17 : f32 to vector<4x1xf32>
    %31 = arith.divf %11, %30 : vector<4x1xf32>
    %c0_18 = arith.constant 0 : index
    %c0_19 = arith.constant 0 : index
    %32 = vector.load %arg6[%c0_18, %c0_19] : memref<4x1xf32, #tpu.memory_space<vmem>>, vector<4x1xf32>
    tpu.vector_store %arg6[%c0_18, %c0_19], %31 {strides = array<i32>} : memref<4x1xf32, #tpu.memory_space<vmem>>, vector<4x1xf32>,
    return
  }
  func.func @transform_0(%arg0: i32) -> (i32, i32, i32) {
    %c0_i32 = arith.constant 0 : i32
    %c0_i32_0 = arith.constant 0 : i32
    %c0_i32_1 = arith.constant 0 : i32
    return %c0_i32, %arg0, %c0_i32_0 : i32, i32, i32
  }
  func.func @transform_1(%arg0: i32) -> (i32, i32) {
    %c0_i32 = arith.constant 0 : i32
    %c0_i32_0 = arith.constant 0 : i32
    return %arg0, %c0_i32 : i32, i32
  }
  func.func @transform_2(%arg0: i32) -> (i32, i32) {
    %c0_i32 = arith.constant 0 : i32
    %c0_i32_0 = arith.constant 0 : i32
    return %arg0, %c0_i32 : i32, i32
  }
  func.func @transform_3(%arg0: i32) -> (i32, i32, i32) {
    %c0_i32 = arith.constant 0 : i32
    %c0_i32_0 = arith.constant 0 : i32
    %c0_i32_1 = arith.constant 0 : i32
    return %c0_i32, %arg0, %c0_i32_0 : i32, i32, i32
  }
  func.func @transform_4(%arg0: i32) -> (i32, i32) {
    %c0_i32 = arith.constant 0 : i32
    %c0_i32_0 = arith.constant 0 : i32
    return %arg0, %c0_i32 : i32, i32
  }
  func.func @transform_5(%arg0: i32) -> (i32, i32) {
    %c0_i32 = arith.constant 0 : i32
    %c0_i32_0 = arith.constant 0 : i32
    return %arg0, %c0_i32 : i32, i32
  }
}

</mosaic_0001>

<llo_original>
// kernel: tpu_custom_call.1
$region0: #{tpu_custom_call.1}
  #allocation0 [shape = 'u32[]', space=smem, size = 0x4, offset = 0x4, fixed_abs, tag = 'smem constant byte address 0x4 - core index']
  #allocation1 [shape = 'u32[72,128]{1,0:T(1,128)}', space=vmem, size = 0x9000, scoped, tag = 'internal scratch']
  %s0 = inlined_call_operand.hbm [shape: f32[2,4,256], index: 0, kind: input, shape index: {}]
  %s1 = inlined_call_operand.vmem [shape: f32[4,1], index: 1, kind: input, shape index: {}]
  %s2 = inlined_call_operand.vmem [shape: f32[4,1], index: 2, kind: input, shape index: {}]
  %s3 = inlined_call_operand.hbm [shape: f32[2,4,256], index: 3, kind: output, shape index: {0}]
  %s4 = inlined_call_operand.vmem [shape: f32[4,1], index: 4, kind: output, shape index: {1}]
  %s5 = inlined_call_operand.vmem [shape: f32[4,1], index: 5, kind: output, shape index: {2}]
  %6 = xla_tuple %s3, %s4, %s5
  %s7 = sld [smem:[#allocation0]]
  $region42: #{tpu_custom_call.1} parent=0
    _
  %s9 = ssub.s32 1, %s7
  %s10 = scalar_select 0, %s9, %s7
  $region1: #{tpu_custom_call.1} parent=0
    #allocation2 [shape = 'u8[8192]{0}', space=vmem, size = 0x2000, scoped, tag = 'input window, operand 0, single buffered']
    #allocation3 [shape = 's32[1]{0}', space=sflag, size = 0x4, scoped, tag = 'scoped memory for tpu_custom_call.1']
    #allocation4 [shape = 's32[1]{0}', space=sflag, size = 0x4, scoped, tag = 'scoped memory for tpu_custom_call.1']
    #allocation5 [shape = 'u8[8192]{0}', space=vmem, size = 0x2000, scoped, tag = 'output window, operand 0, single buffered']
    %11 = vsyncpa [#allocation3], 0
    %12 = vsyncpa [#allocation4], 0
    // Predicated region
    $region2: #{tpu_custom_call.1} parent=1 // pred_check
      _
    $region3: #{tpu_custom_call.1} parent=1 // pred_check_branch
      %14 = sbr.rel (0) target = $region5
    $region4: #{tpu_custom_call.1} parent=1 // pred_region
      %16 = vsyncadd [#allocation3], 0
      %s17 = sshll.u32 %s0, 4
      %s18 = int_to_ptr.hbm [resolvable:$true] %s17
      %s19 = sshll.u32 [#allocation2], 4
      %s20 = int_to_ptr.vmem [resolvable:$true] %s19
      %25 = dma.hbm_to_vmem [thread:$0]  %s18, 256, %s20, [#allocation3], 128, 128, 8
    $region5: #{tpu_custom_call.1} parent=1 // pred_fallthru
      _
    // Predicated region
    $region6: #{tpu_custom_call.1} parent=1 // pred_check
      _
    $region7: #{tpu_custom_call.1} parent=1 // pred_check_branch
      %27 = sbr.rel (0) target = $region9
    $region8: #{tpu_custom_call.1} parent=1 // pred_region
      _
    $region9: #{tpu_custom_call.1} parent=1 // pred_fallthru
      _
    // Predicated region
    $region10: #{tpu_custom_call.1} parent=1 // pred_check
      _
    $region11: #{tpu_custom_call.1} parent=1 // pred_check_branch
      %29 = sbr.rel (0) target = $region13
    $region12: #{tpu_custom_call.1} parent=1 // pred_region
      _
    $region13: #{tpu_custom_call.1} parent=1 // pred_fallthru
      _
    // Predicated region
    $region14: #{tpu_custom_call.1} parent=1 // pred_check
      _
    $region15: #{tpu_custom_call.1} parent=1 // pred_check_branch
      %31 = sbr.rel (0) target = $region17
    $region16: #{tpu_custom_call.1} parent=1 // pred_region
      %33 = dma.done [#allocation3], 256
    $region17: #{tpu_custom_call.1} parent=1 // pred_fallthru
      _
    %v34 = vld [vmem:[#allocation2] sm:$0xff]
    %v35 = vld [vmem:[#allocation2 + $0x8] sm:$0xff]
    %38 = vst [vmem:[#allocation1] ss:$2 sm:$0xff] %v34
    %v39 = vld.sshfl [vmem:[#allocation1] sm:$0xff pattern:$0x75316420]
    %v40 = vld.sshfl [vmem:[#allocation1 + $0x8] sm:$0xff pattern:$0x75316420]
    %s41 = scalar_lea.vmem [#allocation1], 16
    %42 = vst [vmem:[%s41] ss:$2 sm:$0xff] %v35
    %v43 = vld.sshfl [vmem:[#allocation1 + $0x10] sm:$0xff pattern:$0x75316420]
    %v44 = vld.sshfl [vmem:[#allocation1 + $0x18] sm:$0xff pattern:$0x75316420]
    %vm49 = vcmask 1043456
    %v50 = vsel %vm49, %v39, 0.0
    %v51 = vsel %vm49, %v40, 0.0
    %v52 = vadd.f32 %v50, %v51
    %53 = vadd.xlane.f32.xlu0 %v52
    %v54 = vpop.xlane.xlu0 %53
    %v55 = vsel %vm49, %v43, 0.0
    %v56 = vsel %vm49, %v44, 0.0
    %v57 = vadd.f32 %v55, %v56
    %58 = vadd.xlane.f32.xlu0 %v57
    %v59 = vpop.xlane.xlu0 %58
    %v60 = vsel %vm49, %v54, 0.0
    %v61 = vsel %vm49, %v59, 0.0
    %v62 = vadd.f32 %v60, %v61
    %v63 = vmul.f32 %v34, %v34
    %v64 = vmul.f32 %v35, %v35
    %67 = vst [vmem:[#allocation1] ss:$2 sm:$0xff] %v63
    %v68 = vld.sshfl [vmem:[#allocation1] sm:$0xff pattern:$0x75316420]
    %v69 = vld.sshfl [vmem:[#allocation1 + $0x8] sm:$0xff pattern:$0x75316420]
    %s70 = scalar_lea.vmem [#allocation1], 16
    %71 = vst [vmem:[%s70] ss:$2 sm:$0xff] %v64
    %v72 = vld.sshfl [vmem:[#allocation1 + $0x10] sm:$0xff pattern:$0x75316420]
    %v73 = vld.sshfl [vmem:[#allocation1 + $0x18] sm:$0xff pattern:$0x75316420]
    %v78 = vsel %vm49, %v68, 0.0
    %v79 = vsel %vm49, %v69, 0.0
    %v80 = vadd.f32 %v78, %v79
    %81 = vadd.xlane.f32.xlu0 %v80
    %v82 = vpop.xlane.xlu0 %81
    %v83 = vsel %vm49, %v72, 0.0
    %v84 = vsel %vm49, %v73, 0.0
    %v85 = vadd.f32 %v83, %v84
    %86 = vadd.xlane.f32.xlu0 %v85
    %v87 = vpop.xlane.xlu0 %86
    %v88 = vsel %vm49, %v82, 0.0
    %v89 = vsel %vm49, %v87, 0.0
    %v90 = vadd.f32 %v88, %v89
    %v91 = vrcp.pop 512.0
    %v92 = vmul.f32 512.0, %v91
    %v93 = vsub.f32 1.0, %v92
    %v94 = vmul.f32 %v91, %v93
    %v95 = vadd.f32 %v91, %v94
    %vm96 = vweird.f32 %v91
    %v97 = vsel %vm96, %v91, %v95
    %v98 = vmul.f32 %v62, %v97
    %v99 = vmul.f32 %v62, %v98
    %v100 = vsub.f32 %v90, %v99
    %v101 = vmul.f32 %v100, %v97
    %v102 = vadd.f32 %v101, 1e-05
    %v103 = vrsqrt.pop %v102
    %v104 = vmul.f32 %v103, %v102
    %v105 = vmul.f32 %v104, %v103
    %v106 = vmul.f32 0.5, %v105
    %v107 = vsub.f32 1.5, %v106
    %v108 = vmul.f32 %v103, %v107
    %vm109 = vweird.f32 %v102
    %vm110 = vweird.f32 %v103
    %vm111 = vmor %vm109, %vm110
    %v112 = vsel %vm111, %v103, %v108
    %v113 = vld [vmem:[%s1] sm:$0xf]
    %v114 = vmul.f32 %v113, %v112
    %v115 = vld [vmem:[%s2] sm:$0xf]
    %v116 = vmul.f32 %v98, %v114
    %v117 = vsub.f32 %v115, %v116
    %119 = vset.pattern.permute.xlu0 0
    %120 = vperm.xlu0 %119, %v114
    %v121 = vpop.permute.xlu0 %120
    %v123 = vunpack.c.l.s4 839922192
    %v124 = vunpack.c.0.s8 %v123
    %v125 = vperm.slane %v121, %v124
    %v127 = vmul.f32 %v34, %v125
    %v128 = vmul.f32 %v35, %v125
    %130 = vset.pattern.permute.xlu0 0
    %131 = vperm.xlu0 %130, %v117
    %v132 = vpop.permute.xlu0 %131
    %v134 = vunpack.c.l.s4 839922192
    %v135 = vunpack.c.0.s8 %v134
    %v136 = vperm.slane %v132, %v135
    %v138 = vadd.f32 %v127, %v136
    %v139 = vadd.f32 %v128, %v136
    %140 = vst [vmem:[#allocation5] sm:$0xff] %v138
    %141 = vst [vmem:[#allocation5 + $0x8] sm:$0xff] %v139
    %vm142 = vcmask 3072
    %143 = vst.msk [vmem:[%s4] sm:$0xf] %vm142, %v98
    %v144 = vrcp.pop 511.0
    %v145 = vmul.f32 511.0, %v144
    %v146 = vsub.f32 1.0, %v145
    %v147 = vmul.f32 %v144, %v146
    %v148 = vadd.f32 %v144, %v147
    %vm149 = vweird.f32 %v144
    %v150 = vsel %vm149, %v144, %v148
    %v151 = vmul.f32 %v100, %v150
    %152 = vst.msk [vmem:[%s5] sm:$0xf] %vm142, %v151
    // Predicated region
    $region18: #{tpu_custom_call.1} parent=1 // pred_check
      _
    $region19: #{tpu_custom_call.1} parent=1 // pred_check_branch
      %154 = sbr.rel (0) target = $region21
    $region20: #{tpu_custom_call.1} parent=1 // pred_region
      %156 = vsyncadd [#allocation4], 0
      %s157 = sshll.u32 [#allocation5], 4
      %s158 = int_to_ptr.vmem [resolvable:$true] %s157
      %s159 = sshll.u32 %s3, 4
      %s160 = int_to_ptr.hbm [resolvable:$true] %s159
      %165 = dma.vmem_to_hbm [thread:$0]  %s158, 256, %s160, [#allocation4], 128, 128, 8
    $region21: #{tpu_custom_call.1} parent=1 // pred_fallthru
      _
    // Predicated region
    $region22: #{tpu_custom_call.1} parent=1 // pred_check
      _
    $region23: #{tpu_custom_call.1} parent=1 // pred_check_branch
      %167 = sbr.rel (0) target = $region25
    $region24: #{tpu_custom_call.1} parent=1 // pred_region
      _
    $region25: #{tpu_custom_call.1} parent=1 // pred_fallthru
      _
    // Predicated region
    $region26: #{tpu_custom_call.1} parent=1 // pred_check
      _
    $region27: #{tpu_custom_call.1} parent=1 // pred_check_branch
      %169 = sbr.rel (0) target = $region29
    $region28: #{tpu_custom_call.1} parent=1 // pred_region
      _
    $region29: #{tpu_custom_call.1} parent=1 // pred_fallthru
      _
    // Predicated region
    $region30: #{tpu_custom_call.1} parent=1 // pred_check
      _
    $region31: #{tpu_custom_call.1} parent=1 // pred_check_branch
      %171 = sbr.rel (0) target = $region33
    $region32: #{tpu_custom_call.1} parent=1 // pred_region
      %173 = dma.done [#allocation4], 256
    $region33: #{tpu_custom_call.1} parent=1 // pred_fallthru
      _
    // Predicated region
    $region34: #{tpu_custom_call.1} parent=1 // pred_check
      _
    $region35: #{tpu_custom_call.1} parent=1 // pred_check_branch
      %175 = sbr.rel (0) target = $region37
    $region36: #{tpu_custom_call.1} parent=1 // pred_region
      _
    $region37: #{tpu_custom_call.1} parent=1 // pred_fallthru
      _
    // Predicated region
    $region38: #{tpu_custom_call.1} parent=1 // pred_check
      _
    $region39: #{tpu_custom_call.1} parent=1 // pred_check_branch
      %177 = sbr.rel (0) target = $region41
    $region40: #{tpu_custom_call.1} parent=1 // pred_region
      _
    $region41: #{tpu_custom_call.1} parent=1 // pred_fallthru
      _
    %178 = vsyncpa [#allocation3], 1
    %179 = vsyncpa [#allocation4], 1

</llo_original>
